<compile_context>
chip_gen: v7x
topology: tpu7x:2x2x1
jax: 0.10.0
libtpu: 0.0.40
codegen_flags: <defaults>
</compile_context>

<pallas_src>
import jax
import jax.numpy as jnp
from jax.experimental import pallas as pl
from jax.experimental.pallas import tpu as pltpu


# ----------------------------------------------------------------------------
# Pallas kernel: one (batch, tc-tile) step.
#   stage 1 (big MXU matmul):  (tc*H, W) @ (W, out)      -> (tc*H, out)
#   transpose via scratch:     (tc, H, out)              -> (H, tc*out)
#   stage 2 (big-N matmul):    (out, H) @ (H, tc*out)    -> (out, tc*out)
# Input f32 (cast to bf16 in-kernel), f32 accumulation, bf16 store.
# ----------------------------------------------------------------------------
def _resize_kernel(x_ref, wrow_ref, wcolT_ref, out_ref, tbuf_ref):
    out_size, h = wrow_ref.shape            # (out, H)
    tc = x_ref.shape[0] // h                # x block is (tc*H, W)

    # Cast after the block load: the DMA moves the image at its native dtype,
    # the convert is free VPU filler on an HBM-bound kernel.
    a = x_ref[...].astype(jnp.bfloat16)                               # (tc*H, W)

    # Stage 1: column resample (crop + flip folded into wcolT), M = tc*H.
    tmp = jnp.dot(a, wcolT_ref[...],
                  preferred_element_type=jnp.float32)                 # (tc*H, out) f32
    tmp = tmp.astype(jnp.bfloat16)

    # (tc, H, out) -> (H, tc*out): explicit per-plane stores into VMEM scratch.
    # Static slices only, so this always lowers; the relayout cost is what any
    # transpose would pay and hides under the MXU / HBM pipeline.
    for t in range(tc):
        tbuf_ref[:, t * out_size:(t + 1) * out_size] = tmp[t * h:(t + 1) * h, :]

    # Stage 2: row resample as ONE matmul with a big, lane-dense N = tc*out.
    y = jnp.dot(wrow_ref[...], tbuf_ref[...],
                preferred_element_type=jnp.float32)                   # (out, tc*out)
    out_ref[...] = y.astype(out_ref.dtype)


# ----------------------------------------------------------------------------
# VMEM sizing / TC tiling.
# ----------------------------------------------------------------------------
def _vmem_need_bytes(tc_tile, H, W, out_size, in_itemsize, out_itemsize):
    img   = 2 * tc_tile * H * W * in_itemsize              # double-buffered input block
    img_b = tc_tile * H * W * 2                            # in-kernel bf16 copy
    tmp   = tc_tile * H * out_size * (4 + 2)               # stage-1 result f32 + bf16
    tbuf  = H * tc_tile * out_size * 2                     # transpose scratch (bf16)
    y_f32 = out_size * tc_tile * out_size * 4              # stage-2 f32 result
    outb  = 2 * out_size * tc_tile * out_size * out_itemsize   # double-buffered output
    wts   = 2 * (out_size * H + W * out_size) * 2 * 2      # double-buffered bf16 weights
    return img + img_b + tmp + tbuf + y_f32 + outb + wts


def _pick_tc_tile(TC, H, W, out_size, in_itemsize, out_itemsize, budget):
    """Largest divisor of TC whose per-step working set fits `budget` and whose
    block shapes satisfy the (8, 128) tiling rules."""
    def lane_ok(d):
        return d == TC or ((d * out_size) % 128 == 0 and (d * H) % 8 == 0)

    divisors = [d for d in range(TC, 0, -1) if TC % d == 0]
    for d in divisors:
        if lane_ok(d) and _vmem_need_bytes(d, H, W, out_size,
                                           in_itemsize, out_itemsize) <= budget:
            return d
    for d in reversed(divisors):                      # fallback: smallest valid tile
        if lane_ok(d):
            return d
    return TC


def _resize_pallas(x_flat, w_row, w_colT, out_size, out_dtype):
    """x_flat: (B, TC*H, W) native dtype; w_row: (B, out, H) bf16;
    w_colT: (B, W, out) bf16.  Returns (B, out, TC*out) in out_dtype."""
    B, TCH, W = x_flat.shape
    _, _, H = w_row.shape
    TC = TCH // H

    # Derive a VMEM cap from the chip (stay well under v7x's 64 MiB physical).
    try:
        phys_vmem = int(pltpu.get_tpu_info().vmem_capacity_bytes)
    except Exception:
        phys_vmem = 64 * 2 ** 20
    vmem_cap = min(48 * 2 ** 20, (3 * phys_vmem) // 4)

    in_itemsize = x_flat.dtype.itemsize
    out_itemsize = jnp.dtype(out_dtype).itemsize
    tc_tile = _pick_tc_tile(TC, H, W, out_size, in_itemsize, out_itemsize, vmem_cap)
    n_t = TC // tc_tile

    grid_spec = pltpu.PrefetchScalarGridSpec(
        num_scalar_prefetch=0,
        grid=(B, n_t),
        in_specs=[
            pl.BlockSpec((None, tc_tile * H, W), lambda b, t: (b, t, 0)),
            pl.BlockSpec((None, out_size, H), lambda b, t: (b, 0, 0)),
            pl.BlockSpec((None, W, out_size), lambda b, t: (b, 0, 0)),
        ],
        out_specs=pl.BlockSpec((None, out_size, tc_tile * out_size),
                               lambda b, t: (b, 0, t)),
        scratch_shapes=[pltpu.VMEM((H, tc_tile * out_size), jnp.bfloat16)],
    )

    return pl.pallas_call(
        _resize_kernel,
        out_shape=jax.ShapeDtypeStruct((B, out_size, TC * out_size), out_dtype),
        grid_spec=grid_spec,
        compiler_params=pltpu.CompilerParams(
            dimension_semantics=("parallel", "parallel"),
            vmem_limit_bytes=int(vmem_cap),
        ),
    )(x_flat, w_row, w_colT)


# ----------------------------------------------------------------------------
# Glue: bicubic (a = -0.75, align_corners=False) weight matrices for a crop.
# ----------------------------------------------------------------------------
def _bicubic_weight_matrix(crop_start, crop_size, in_size, out_size):
    """Returns (out_size, in_size) resampling matrix for one axis."""
    A = -0.75

    def w1(x):  # |x| <= 1
        return ((A + 2.0) * x - (A + 3.0)) * x * x + 1.0

    def w2(x):  # 1 < |x| < 2
        return ((A * x - 5.0 * A) * x + 8.0 * A) * x - 4.0 * A

    crop_f = crop_size.astype(jnp.float32)
    dst = jnp.arange(out_size, dtype=jnp.float32)
    src = (dst + 0.5) * (crop_f / out_size) - 0.5          # source coord in crop frame
    base = jnp.floor(src)
    t = src - base
    weights = jnp.stack([w2(t + 1.0), w1(t), w1(1.0 - t), w2(2.0 - t)], axis=-1)  # (out, 4)

    offs = jnp.arange(-1, 3, dtype=jnp.int32)
    idx = base.astype(jnp.int32)[:, None] + offs[None, :]                # (out, 4)
    # Clamp inside the crop box (crop-then-resize semantics), then shift into image.
    idx = jnp.clip(idx, 0, crop_size - 1) + crop_start
    onehot = (idx[:, :, None] == jnp.arange(in_size)[None, None, :]).astype(jnp.float32)
    return jnp.einsum("ok,oki->oi", weights, onehot)                      # (out, in_size)


def _sample_crop(key, H, W, scale, ratio):
    """Approximate torchvision RandomResizedCrop.get_params for one sample."""
    # TODO(synk): torchvision's 10-attempt rejection loop + center-crop fallback is
    # approximated here by a single draw with clamping of the crop box.
    k1, k2, k3, k4 = jax.random.split(key, 4)
    area = float(H * W)
    target_area = area * jax.random.uniform(k1, minval=scale[0], maxval=scale[1])
    log_ratio = jax.random.uniform(
        k2, minval=float(jnp.log(ratio[0])), maxval=float(jnp.log(ratio[1]))
    )
    ar = jnp.exp(log_ratio)
    cw = jnp.clip(jnp.round(jnp.sqrt(target_area * ar)), 1, W).astype(jnp.int32)
    ch = jnp.clip(jnp.round(jnp.sqrt(target_area / ar)), 1, H).astype(jnp.int32)
    top = jnp.floor(jax.random.uniform(k3) * (H - ch + 1).astype(jnp.float32)).astype(jnp.int32)
    left = jnp.floor(jax.random.uniform(k4) * (W - cw + 1).astype(jnp.float32)).astype(jnp.int32)
    return top, left, ch, cw


def data_aug(x, out_size, key, scale=(0.8, 1.0), ratio=(3.0 / 4.0, 4.0 / 3.0),
             flip_prob=0.5):
    """x: (B, T, C, H, W) float -> (B, T, C, out_size, out_size) in x.dtype.

    Same random crop + same random horizontal flip applied to all T*C planes
    within a batch element (matching the PyTorch per-bid loop).
    """
    B, T, C, H, W = x.shape
    assert H == W
    assert H % 8 == 0, "H must be a multiple of 8 (TPU sublane tiling)"
    # TODO(synk): pad H/W to a multiple of 8 instead of asserting for odd shapes.

    keys = jax.random.split(key, B + 1)
    flip_key, crop_keys = keys[0], keys[1:]

    tops, lefts, chs, cws = jax.vmap(
        lambda k: _sample_crop(k, H, W, scale, ratio)
    )(crop_keys)

    w_row = jax.vmap(lambda t, h: _bicubic_weight_matrix(t, h, H, out_size))(tops, chs)   # (B,out,H)
    w_col = jax.vmap(lambda l, w: _bicubic_weight_matrix(l, w, W, out_size))(lefts, cws)  # (B,out,W)

    # Horizontal flip with prob flip_prob: fold into the column weight matrix by
    # reversing its output-index axis (per batch element).
    flip = jax.random.uniform(flip_key, (B,)) < flip_prob
    w_col = jnp.where(flip[:, None, None], w_col[:, ::-1, :], w_col)

    # Pre-transpose in the glue so the in-kernel dot contracts contiguous dims.
    w_colT = jnp.swapaxes(w_col, 1, 2)                                   # (B, W, out)

    TC = T * C
    # (B, T, C, H, W) -> (B, TC*H, W): free contiguous reshape; the image stays
    # in its native dtype (the kernel casts to bf16 after the block load).
    x_flat = x.reshape(B, TC * H, W)

    # Kernel writes bf16 (lane-dense (out, TC*out) layout) to halve writeback
    # traffic; the unpack transpose below converts back to x.dtype in the same
    # fused XLA pass, so the public output dtype matches the PyTorch module.
    y_flat = _resize_pallas(
        x_flat, w_row.astype(jnp.bfloat16), w_colT.astype(jnp.bfloat16),
        out_size, out_dtype=jnp.bfloat16,
    )                                                                     # (B, out, TC*out)

    y = y_flat.reshape(B, out_size, T, C, out_size)
    y = jnp.transpose(y, (0, 2, 3, 1, 4)).astype(x.dtype)                 # (B,T,C,out,out)
    return y


if __name__ == "__main__":
    key = jax.random.PRNGKey(0)
    kx, kaug = jax.random.split(key)

    B, T, C, H, W = 2, 2, 3, 16, 16
    out_size = 8
    x = jax.random.uniform(kx, (B, T, C, H, W), dtype=jnp.float32)

    y = data_aug(x, out_size, key=kaug)
    y = jax.block_until_ready(y)

    assert y.shape == (B, T, C, out_size, out_size), y.shape
    assert y.dtype == jnp.float32
    assert bool(jnp.all(jnp.isfinite(y)))
    print("KERNEL_OK")
</pallas_src>

<mosaic_0001>
module attributes {stable_mosaic.version = 11 : i64} {
  func.func @_resize_kernel(%arg0: i32, %arg1: i32, %arg2: memref<1x96x16xf32, #tpu.memory_space<vmem>>, %arg3: memref<1x8x16xbf16, #tpu.memory_space<vmem>>, %arg4: memref<1x16x8xbf16, #tpu.memory_space<vmem>>, %arg5: memref<1x8x48xbf16, #tpu.memory_space<vmem>>, %arg6: memref<16x48xbf16, #tpu.memory_space<vmem>>) attributes {dimension_semantics = [#tpu.dimension_semantics<parallel>, #tpu.dimension_semantics<parallel>], iteration_bounds = array<i64: 2, 1>, scalar_prefetch = 0 : i64, scratch_operands = 1 : i64, tpu.core_type = #tpu.core_type<tc>, window_params = [{transform_indices = @transform_0, window_bounds = array<i64: 1, 96, 16>}, {transform_indices = @transform_1, window_bounds = array<i64: 1, 8, 16>}, {transform_indices = @transform_2, window_bounds = array<i64: 1, 16, 8>}, {transform_indices = @transform_3, window_bounds = array<i64: 1, 8, 48>}]} {
    %c0 = arith.constant 0 : index
    %c0_0 = arith.constant 0 : index
    %c0_1 = arith.constant 0 : index
    %0 = vector.load %arg2[%c0, %c0_0, %c0_1] : memref<1x96x16xf32, #tpu.memory_space<vmem>>, vector<1x96x16xf32>
    %1 = vector.shape_cast %0 : vector<1x96x16xf32> to vector<96x16xf32>
    %2 = arith.truncf %1 : vector<96x16xf32> to vector<96x16xbf16>
    %c0_2 = arith.constant 0 : index
    %c0_3 = arith.constant 0 : index
    %c0_4 = arith.constant 0 : index
    %3 = vector.load %arg4[%c0_2, %c0_3, %c0_4] : memref<1x16x8xbf16, #tpu.memory_space<vmem>>, vector<1x16x8xbf16>
    %4 = vector.shape_cast %3 : vector<1x16x8xbf16> to vector<16x8xbf16>
    %cst = arith.constant dense<0.000000e+00> : vector<96x8xf32>
    %5 = tpu.matmul %2, %4, %cst {dimension_numbers = #tpu.dot_dimension_numbers<[1], [0], [0], [1], [0, 0, 1, 1], [], []>} : vector<96x16xbf16>, vector<16x8xbf16>, vector<96x8xf32> -> vector<96x8xf32>
    %6 = arith.truncf %5 : vector<96x8xf32> to vector<96x8xbf16>
    %7 = vector.extract_strided_slice %6 {offsets = [0, 0], sizes = [16, 8], strides = [1, 1]} : vector<96x8xbf16> to vector<16x8xbf16>
    %c0_5 = arith.constant 0 : index
    %c0_6 = arith.constant 0 : index
    %8 = vector.load %arg6[%c0_5, %c0_6] : memref<16x48xbf16, #tpu.memory_space<vmem>>, vector<16x8xbf16>
    tpu.vector_store %arg6[%c0_5, %c0_6], %7 {strides = array<i32>} : memref<16x48xbf16, #tpu.memory_space<vmem>>, vector<16x8xbf16>,
    %9 = vector.extract_strided_slice %6 {offsets = [16, 0], sizes = [16, 8], strides = [1, 1]} : vector<96x8xbf16> to vector<16x8xbf16>
    %c0_7 = arith.constant 0 : index
    %c8 = arith.constant 8 : index
    %10 = vector.load %arg6[%c0_7, %c8] : memref<16x48xbf16, #tpu.memory_space<vmem>>, vector<16x8xbf16>
    tpu.vector_store %arg6[%c0_7, %c8], %9 {strides = array<i32>} : memref<16x48xbf16, #tpu.memory_space<vmem>>, vector<16x8xbf16>,
    %11 = vector.extract_strided_slice %6 {offsets = [32, 0], sizes = [16, 8], strides = [1, 1]} : vector<96x8xbf16> to vector<16x8xbf16>
    %c0_8 = arith.constant 0 : index
    %c16 = arith.constant 16 : index
    %12 = vector.load %arg6[%c0_8, %c16] : memref<16x48xbf16, #tpu.memory_space<vmem>>, vector<16x8xbf16>
    tpu.vector_store %arg6[%c0_8, %c16], %11 {strides = array<i32>} : memref<16x48xbf16, #tpu.memory_space<vmem>>, vector<16x8xbf16>,
    %13 = vector.extract_strided_slice %6 {offsets = [48, 0], sizes = [16, 8], strides = [1, 1]} : vector<96x8xbf16> to vector<16x8xbf16>
    %c0_9 = arith.constant 0 : index
    %c24 = arith.constant 24 : index
    %14 = vector.load %arg6[%c0_9, %c24] : memref<16x48xbf16, #tpu.memory_space<vmem>>, vector<16x8xbf16>
    tpu.vector_store %arg6[%c0_9, %c24], %13 {strides = array<i32>} : memref<16x48xbf16, #tpu.memory_space<vmem>>, vector<16x8xbf16>,
    %15 = vector.extract_strided_slice %6 {offsets = [64, 0], sizes = [16, 8], strides = [1, 1]} : vector<96x8xbf16> to vector<16x8xbf16>
    %c0_10 = arith.constant 0 : index
    %c32 = arith.constant 32 : index
    %16 = vector.load %arg6[%c0_10, %c32] : memref<16x48xbf16, #tpu.memory_space<vmem>>, vector<16x8xbf16>
    tpu.vector_store %arg6[%c0_10, %c32], %15 {strides = array<i32>} : memref<16x48xbf16, #tpu.memory_space<vmem>>, vector<16x8xbf16>,
    %17 = vector.extract_strided_slice %6 {offsets = [80, 0], sizes = [16, 8], strides = [1, 1]} : vector<96x8xbf16> to vector<16x8xbf16>
    %c0_11 = arith.constant 0 : index
    %c40 = arith.constant 40 : index
    %18 = vector.load %arg6[%c0_11, %c40] : memref<16x48xbf16, #tpu.memory_space<vmem>>, vector<16x8xbf16>
    tpu.vector_store %arg6[%c0_11, %c40], %17 {strides = array<i32>} : memref<16x48xbf16, #tpu.memory_space<vmem>>, vector<16x8xbf16>,
    %c0_12 = arith.constant 0 : index
    %c0_13 = arith.constant 0 : index
    %c0_14 = arith.constant 0 : index
    %19 = vector.load %arg3[%c0_12, %c0_13, %c0_14] : memref<1x8x16xbf16, #tpu.memory_space<vmem>>, vector<1x8x16xbf16>
    %20 = vector.shape_cast %19 : vector<1x8x16xbf16> to vector<8x16xbf16>
    %c0_15 = arith.constant 0 : index
    %c0_16 = arith.constant 0 : index
    %21 = vector.load %arg6[%c0_15, %c0_16] : memref<16x48xbf16, #tpu.memory_space<vmem>>, vector<16x48xbf16>
    %cst_17 = arith.constant dense<0.000000e+00> : vector<8x48xf32>
    %22 = tpu.matmul %20, %21, %cst_17 {dimension_numbers = #tpu.dot_dimension_numbers<[1], [0], [0], [1], [0, 0, 1, 1], [], []>} : vector<8x16xbf16>, vector<16x48xbf16>, vector<8x48xf32> -> vector<8x48xf32>
    %23 = arith.truncf %22 : vector<8x48xf32> to vector<8x48xbf16>
    %c0_18 = arith.constant 0 : index
    %c0_19 = arith.constant 0 : index
    %c0_20 = arith.constant 0 : index
    %24 = vector.load %arg5[%c0_18, %c0_19, %c0_20] : memref<1x8x48xbf16, #tpu.memory_space<vmem>>, vector<1x8x48xbf16>
    %25 = vector.shape_cast %24 : vector<1x8x48xbf16> to vector<8x48xbf16>
    %26 = vector.shape_cast %23 : vector<8x48xbf16> to vector<1x8x48xbf16>
    tpu.vector_store %arg5[%c0_18, %c0_19, %c0_20], %26 {strides = array<i32>} : memref<1x8x48xbf16, #tpu.memory_space<vmem>>, vector<1x8x48xbf16>,
    return
  }
  func.func @transform_0(%arg0: i32, %arg1: i32) -> (i32, i32, i32) {
    %c0_i32 = arith.constant 0 : i32
    %c0_i32_0 = arith.constant 0 : i32
    return %arg0, %arg1, %c0_i32 : i32, i32, i32
  }
  func.func @transform_1(%arg0: i32, %arg1: i32) -> (i32, i32, i32) {
    %c0_i32 = arith.constant 0 : i32
    %c0_i32_0 = arith.constant 0 : i32
    %c0_i32_1 = arith.constant 0 : i32
    return %arg0, %c0_i32, %c0_i32_0 : i32, i32, i32
  }
  func.func @transform_2(%arg0: i32, %arg1: i32) -> (i32, i32, i32) {
    %c0_i32 = arith.constant 0 : i32
    %c0_i32_0 = arith.constant 0 : i32
    %c0_i32_1 = arith.constant 0 : i32
    return %arg0, %c0_i32, %c0_i32_0 : i32, i32, i32
  }
  func.func @transform_3(%arg0: i32, %arg1: i32) -> (i32, i32, i32) {
    %c0_i32 = arith.constant 0 : i32
    %c0_i32_0 = arith.constant 0 : i32
    return %arg0, %c0_i32, %arg1 : i32, i32, i32
  }
}

</mosaic_0001>

<llo_original>
// kernel: tpu_custom_call.1
$region0: #{tpu_custom_call.1}
  #allocation0 [shape = 'u32[]', space=smem, size = 0x4, offset = 0x4, fixed_abs, tag = 'smem constant byte address 0x4 - core index']
  #allocation1 [shape = 'u32[144,128]{1,0:T(1,128)}', space=vmem, size = 0x12000, scoped, tag = 'internal scratch']
  #allocation2 [shape = 'bf16[16,48]{1,0:T(16,128)(2,1)}', space=vmem, size = 0x1000, scoped, tag = 'scratch operand']
  %s0 = inlined_call_operand.vmem [shape: f32[2,96,16], index: 0, kind: input, shape index: {}]
  %s1 = inlined_call_operand.vmem [shape: bf16[2,8,16], index: 1, kind: input, shape index: {}]
  %s2 = inlined_call_operand.vmem [shape: bf16[2,16,8], index: 2, kind: input, shape index: {}]
  %s3 = inlined_call_operand.hbm [shape: bf16[2,8,48], index: 3, kind: output, shape index: {}]
  %s4 = sld [smem:[#allocation0]]
  $region45: #{tpu_custom_call.1} parent=0
    _
  %s6 = ssub.s32 1, %s4
  %s7 = scalar_select 0, %s6, %s4
  $region1: #{tpu_custom_call.1} parent=0
    #allocation3 [shape = 'u8[4096]{0}', space=vmem, size = 0x1000, scoped, tag = 'output window, operand 0']
    #allocation4 [shape = 's32[2]{0}', space=sflag, size = 0x8, scoped, tag = 'scoped memory for tpu_custom_call.1']
    %8 = vsyncpa [#allocation4], 0
    %s9 = scalar_lea.sflag [#allocation4], 1
    %10 = vsyncpa %s9, 0
    loop: start=0, step=1, limit=4
    $region2: #{tpu_custom_call.1} parent=1 // loop_pre_header
      _
    $region3: #{tpu_custom_call.1} parent=1 // loop_header
      %s12 = sphi 0, %s16
      %p13 = scmp.ge.s32.totalorder %s12, 4
      %s19 = sphi 0, %s31
      %s20 = sphi 0, %s27
      %s21 = sphi 0, %s19
      %s22 = sphi 0, %s20
      %s23 = sphi 0, %s21
      %s24 = sphi 0, %s22
      %s36 = sphi 0, %s38
      %s39 = sphi 0, %s36
      %s40 = sphi 0, %s39
      %s56 = sphi 0, %s40
      %s62 = sphi 0, %s64
      %s65 = sphi 0, %s62
      %s66 = sphi 0, %s65
      %s82 = sphi 0, %s66
      %s88 = sphi 0, %s90
      %s91 = sphi 0, %s88
      %s92 = sphi 0, %s91
      %s108 = sphi 0, %s92
      %s116 = sphi 0, %s118
      %s119 = sphi 0, %s116
      %s120 = sphi 0, %s119
      %s136 = sphi 0, %s120
    $region4: #{tpu_custom_call.1} parent=1 // loop_header_branch
      %15 = sbr.rel (%p13) target = $region8
    $region5: #{tpu_custom_call.1} parent=1 // loop_body
      %s17 = ssub.s32 %s12, 1
      %s18 = ssub.s32 %s12, 2
      %s25 = sadd.s32 1, %s20
      %p26 = scmp.ge.s32.totalorder %s25, 1
      %s27 = scalar_select %p26, 0, %s25
      %s28 = sadd.s32 1, %s19
      %s29 = scalar_select %p26, %s28, %s19
      %p30 = scmp.ge.s32.totalorder %s29, 2
      %s31 = scalar_select %p30, 0, %s29
      %s32 = ssub.s32 %s19, %s31
      %s33 = ssub.s32 %s20, %s27
      %s34 = sor.u32 %s32, %s33
      %p35 = scmp.eq.s32.totalorder %s34, 0
      %s37 = sadd.s32 %s36, 1
      %s38 = scalar_select %p35, %s36, %s37
      %p41 = pneg %p35
      %p42 = scmp.eq.s32.totalorder %s12, 1
      %p43 = por %p41, %p42
      %p44 = scmp.ne.s32.totalorder %s36, %s39
      %p45 = scmp.eq.s32.totalorder %s12, 0
      %p46 = por %p44, %p45
      %p47 = scmp.ne.s32.totalorder %s36, %s39
      %p48 = scmp.eq.s32.totalorder %s17, 1
      %p49 = por %p47, %p48
      %p50 = scmp.ne.s32.totalorder %s39, %s40
      %p51 = scmp.eq.s32.totalorder %s17, 0
      %p52 = por %p50, %p51
      %p53 = scmp.ne.s32.totalorder %s39, %s40
      %p54 = scmp.eq.s32.totalorder %s18, 1
      %p55 = por %p53, %p54
      %p57 = scmp.ne.s32.totalorder %s40, %s56
      %p58 = scmp.eq.s32.totalorder %s18, 0
      %p59 = por %p57, %p58
      %s60 = ssub.s32 %s19, %s31
      %p61 = scmp.eq.s32.totalorder %s60, 0
      %s63 = sadd.s32 %s62, 1
      %s64 = scalar_select %p61, %s62, %s63
      %p67 = pneg %p61
      %p68 = scmp.eq.s32.totalorder %s12, 1
      %p69 = por %p67, %p68
      %p70 = scmp.ne.s32.totalorder %s62, %s65
      %p71 = scmp.eq.s32.totalorder %s12, 0
      %p72 = por %p70, %p71
      %p73 = scmp.ne.s32.totalorder %s62, %s65
      %p74 = scmp.eq.s32.totalorder %s17, 1
      %p75 = por %p73, %p74
      %p76 = scmp.ne.s32.totalorder %s65, %s66
      %p77 = scmp.eq.s32.totalorder %s17, 0
      %p78 = por %p76, %p77
      %p79 = scmp.ne.s32.totalorder %s65, %s66
      %p80 = scmp.eq.s32.totalorder %s18, 1
      %p81 = por %p79, %p80
      %p83 = scmp.ne.s32.totalorder %s66, %s82
      %p84 = scmp.eq.s32.totalorder %s18, 0
      %p85 = por %p83, %p84
      %s86 = ssub.s32 %s19, %s31
      %p87 = scmp.eq.s32.totalorder %s86, 0
      %s89 = sadd.s32 %s88, 1
      %s90 = scalar_select %p87, %s88, %s89
      %p93 = pneg %p87
      %p94 = scmp.eq.s32.totalorder %s12, 1
      %p95 = por %p93, %p94
      %p96 = scmp.ne.s32.totalorder %s88, %s91
      %p97 = scmp.eq.s32.totalorder %s12, 0
      %p98 = por %p96, %p97
      %p99 = scmp.ne.s32.totalorder %s88, %s91
      %p100 = scmp.eq.s32.totalorder %s17, 1
      %p101 = por %p99, %p100
      %p102 = scmp.ne.s32.totalorder %s91, %s92
      %p103 = scmp.eq.s32.totalorder %s17, 0
      %p104 = por %p102, %p103
      %p105 = scmp.ne.s32.totalorder %s91, %s92
      %p106 = scmp.eq.s32.totalorder %s18, 1
      %p107 = por %p105, %p106
      %p109 = scmp.ne.s32.totalorder %s92, %s108
      %p110 = scmp.eq.s32.totalorder %s18, 0
      %p111 = por %p109, %p110
      %s112 = ssub.s32 %s19, %s31
      %s113 = ssub.s32 %s20, %s27
      %s114 = sor.u32 %s112, %s113
      %p115 = scmp.eq.s32.totalorder %s114, 0
      %s117 = sadd.s32 %s116, 1
      %s118 = scalar_select %p115, %s116, %s117
      %p121 = pneg %p115
      %p122 = scmp.eq.s32.totalorder %s12, 1
      %p123 = por %p121, %p122
      %p124 = scmp.ne.s32.totalorder %s116, %s119
      %p125 = scmp.eq.s32.totalorder %s12, 0
      %p126 = por %p124, %p125
      %p127 = scmp.ne.s32.totalorder %s116, %s119
      %p128 = scmp.eq.s32.totalorder %s17, 1
      %p129 = por %p127, %p128
      %p130 = scmp.ne.s32.totalorder %s119, %s120
      %p131 = scmp.eq.s32.totalorder %s17, 0
      %p132 = por %p130, %p131
      %p133 = scmp.ne.s32.totalorder %s119, %s120
      %p134 = scmp.eq.s32.totalorder %s18, 1
      %p135 = por %p133, %p134
      %p137 = scmp.ne.s32.totalorder %s120, %s136
      %p138 = scmp.eq.s32.totalorder %s18, 0
      %p139 = por %p137, %p138
      %p140 = scmp.le.s32.totalorder 1, %s12
      %p141 = scmp.lt.s32.totalorder %s12, 3
      %p142 = pnand %p140, %p141
      %p143 = pneg %p142
      // Predicated region
      $region9: #{tpu_custom_call.1} parent=5 // pred_check
        _
      $region10: #{tpu_custom_call.1} parent=5 // pred_check_branch
        %145 = sbr.rel (%p142) target = $region12
      $region11: #{tpu_custom_call.1} parent=5 // pred_region
        %s146 = ssub.s32 %s12, 1
      $region12: #{tpu_custom_call.1} parent=5 // pred_fallthru
        _
      %p147 = scmp.lt.s32.totalorder %s12, 2
      // Predicated region
      $region13: #{tpu_custom_call.1} parent=5 // pred_check
        %p148 = pneg %p147
      $region14: #{tpu_custom_call.1} parent=5 // pred_check_branch
        %150 = sbr.rel (%p148) target = $region16
      $region15: #{tpu_custom_call.1} parent=5 // pred_region
        // Predicated region
        $region17: #{tpu_custom_call.1} parent=15 // pred_check
          %p151 = pneg %p46
        $region18: #{tpu_custom_call.1} parent=15 // pred_check_branch
          %153 = sbr.rel (%p151) target = $region20
        $region19: #{tpu_custom_call.1} parent=15 // pred_region
          %s154 = smul.u32 12, %s20
          %p155 = scmp.lt.s32.totalorder %s19, 1
          %s156 = scalar_select %p155, %s19, 1
          %p157 = scmp.lt.s32.totalorder %s154, 11
          %s158 = scalar_select %p157, %s154, 11
          %s159 = smul.addr %s156, 12
          %s160 = sadd.s32 %s158, %s159
          %s161 = smul.addr %s160, 8
          %s162 = scalar_lea.vmem %s0, %s161
          %s163 = smul.u32 12, %s20
        $region20: #{tpu_custom_call.1} parent=15 // pred_fallthru
          _
        // Predicated region
        $region21: #{tpu_custom_call.1} parent=15 // pred_check
          %p164 = pneg %p72
        $region22: #{tpu_custom_call.1} parent=15 // pred_check_branch
          %166 = sbr.rel (%p164) target = $region24
        $region23: #{tpu_custom_call.1} parent=15 // pred_region
          %p167 = scmp.lt.s32.totalorder %s19, 1
          %s168 = scalar_select %p167, %s19, 1
          %s169 = smul.addr %s168, 4
          %s170 = scalar_lea.vmem %s1, %s169
        $region24: #{tpu_custom_call.1} parent=15 // pred_fallthru
          _
        // Predicated region
        $region25: #{tpu_custom_call.1} parent=15 // pred_check
          %p171 = pneg %p98
        $region26: #{tpu_custom_call.1} parent=15 // pred_check_branch
          %173 = sbr.rel (%p171) target = $region28
        $region27: #{tpu_custom_call.1} parent=15 // pred_region
          %p174 = scmp.lt.s32.totalorder %s19, 1
          %s175 = scalar_select %p174, %s19, 1
          %s176 = smul.addr %s175, 2
          %s177 = smul.addr %s176, 4
          %s178 = scalar_lea.vmem %s2, %s177
        $region28: #{tpu_custom_call.1} parent=15 // pred_fallthru
          _
      $region16: #{tpu_custom_call.1} parent=5 // pred_fallthru
        _
      %p179 = scmp.le.s32.totalorder 1, %s12
      %p180 = scmp.lt.s32.totalorder %s12, 3
      %p181 = pnand %p179, %p180
      %p182 = pneg %p181
      // Predicated region
      $region29: #{tpu_custom_call.1} parent=5 // pred_check
        _
      $region30: #{tpu_custom_call.1} parent=5 // pred_check_branch
        %184 = sbr.rel (%p181) target = $region32
      $region31: #{tpu_custom_call.1} parent=5 // pred_region
        %s185 = ssub.s32 %s12, 1
        %s186 = smul.u32 12, %s22
        %p187 = scmp.lt.s32.totalorder %s21, 1
        %s188 = scalar_select %p187, %s21, 1
        %p189 = scmp.lt.s32.totalorder %s186, 11
        %s190 = scalar_select %p189, %s186, 11
        %s191 = smul.addr %s188, 12
        %s192 = sadd.s32 %s190, %s191
        %s193 = smul.addr %s192, 8
        %s194 = scalar_lea.vmem %s0, %s193
        %p195 = pneg %p52
        %p196 = pneg %p49
        %p197 = scmp.lt.s32.totalorder %s21, 1
        %s198 = scalar_select %p197, %s21, 1
        %s199 = smul.addr %s198, 4
        %s200 = scalar_lea.vmem %s1, %s199
        %p201 = pneg %p78
        %p202 = pneg %p75
        %p203 = scmp.lt.s32.totalorder %s21, 1
        %s204 = scalar_select %p203, %s21, 1
        %s205 = smul.addr %s204, 2
        %s206 = smul.addr %s205, 4
        %s207 = scalar_lea.vmem %s2, %s206
        %p208 = pneg %p104
        %p209 = pneg %p101
        %p210 = pneg %p132
        %p211 = pneg %p129
        %s212 = sand.u32 %s119, 1
        %s213 = scalar_lea.sflag [#allocation4], %s212
        %s214 = sand.u32 %s119, 1
        %s215 = smul.addr %s214, 4
        %s216 = scalar_lea.vmem [#allocation3], %s215
        %s217 = smul.u32 12, %s22
        %p218 = scmp.lt.s32.totalorder %s21, 1
        %s219 = scalar_select %p218, %s21, 1
        %p220 = scmp.lt.s32.totalorder %s217, 11
        %s221 = scalar_select %p220, %s217, 11
        %s222 = smul.addr %s219, 12
        %s223 = sadd.s32 %s221, %s222
        %s224 = smul.addr %s223, 8
        %s225 = scalar_lea.vmem %s0, %s224
        %s226 = smul.u32 12, %s22
        %p227 = scmp.lt.s32.totalorder %s21, 1
        %s228 = scalar_select %p227, %s21, 1
        %s229 = smul.addr %s228, 4
        %s230 = scalar_lea.vmem %s1, %s229
        %p231 = scmp.lt.s32.totalorder %s21, 1
        %s232 = scalar_select %p231, %s21, 1
        %s233 = smul.addr %s232, 2
        %s234 = smul.addr %s233, 4
        %s235 = scalar_lea.vmem %s2, %s234
        %v237 = vld [vmem:[%s225] sm:$0xff]
        %v238 = vld [vmem:[%s225 + $0x8] sm:$0xff]
        %v239 = vld [vmem:[%s225 + $0x10] sm:$0xff]
        %v240 = vld [vmem:[%s225 + $0x18] sm:$0xff]
        %v241 = vld [vmem:[%s225 + $0x20] sm:$0xff]
        %v242 = vld [vmem:[%s225 + $0x28] sm:$0xff]
        %v243 = vld [vmem:[%s225 + $0x30] sm:$0xff]
        %v244 = vld [vmem:[%s225 + $0x38] sm:$0xff]
        %v245 = vld [vmem:[%s225 + $0x40] sm:$0xff]
        %v246 = vld [vmem:[%s225 + $0x48] sm:$0xff]
        %v247 = vld [vmem:[%s225 + $0x50] sm:$0xff]
        %v248 = vld [vmem:[%s225 + $0x58] sm:$0xff]
        %v249 = vpack.c.bf16 %v238, %v237
        %v250 = vpack.c.bf16 %v240, %v239
        %v251 = vpack.c.bf16 %v242, %v241
        %v252 = vpack.c.bf16 %v244, %v243
        %v253 = vpack.c.bf16 %v246, %v245
        %v254 = vpack.c.bf16 %v248, %v247
        %v255 = vld [vmem:[%s235] sm:$0xf]
        %v256 = vld [vmem:[%s235 + $0x4] sm:$0xf]
        %v259 = vunpack.c.l.b16 %v255
        %v260 = vunpack.c.l.b16 %v256
        %v261 = vpack.c.b16 %v260, %v259
        %vm263 = vcmask 130048
        %v265 = vsel %vm263, %v249, 0
        %v268 = vsel %vm263, %v250, 0
        %v271 = vsel %vm263, %v251, 0
        %v274 = vsel %vm263, %v252, 0
        %v277 = vsel %vm263, %v253, 0
        %v280 = vsel %vm263, %v254, 0
        %282 = vmatprep.subr.bf16.mxu0 0
        %283 = vmatpush1.bf16.msra.mxu0 %v261
        %284 = vmatprep.subr.bf16.mxu0 0
        %285 = vmatpush1.bf16.msra.mxu0 0
        %286 = vmatprep.subr.bf16.mxu0 0
        %287 = vmatpush1.bf16.msra.mxu0 0
        %288 = vmatprep.subr.bf16.mxu0 0
        %289 = vmatpush1.bf16.msra.mxu0 0
        %290 = vmatprep.subr.bf16.mxu0 0
        %291 = vmatpush1.bf16.msra.mxu0 0
        %292 = vmatprep.subr.bf16.mxu0 0
        %293 = vmatpush1.bf16.msra.mxu0 0
        %294 = vmatprep.subr.bf16.mxu0 0
        %295 = vmatpush1.bf16.msra.mxu0 0
        %296 = vmatprep.subr.bf16.mxu0 0
        %297 = vmatpush1.bf16.msra.mxu0 0
        %298 = vmatprep.subr.bf16.mxu0 0
        %299 = vmatpush1.bf16.msra.mxu0 0
        %300 = vmatprep.subr.bf16.mxu0 0
        %301 = vmatpush1.bf16.msra.mxu0 0
        %302 = vmatprep.subr.bf16.mxu0 0
        %303 = vmatpush1.bf16.msra.mxu0 0
        %304 = vmatprep.subr.bf16.mxu0 0
        %305 = vmatpush1.bf16.msra.mxu0 0
        %306 = vmatprep.subr.bf16.mxu0 0
        %307 = vmatpush1.bf16.msra.mxu0 0
        %308 = vmatprep.subr.bf16.mxu0 0
        %309 = vmatpush1.bf16.msra.mxu0 0
        %310 = vmatprep.subr.bf16.mxu0 0
        %311 = vmatpush1.bf16.msra.mxu0 0
        %312 = vmatprep.subr.bf16.mxu0 0
        %313 = vmatpush1.bf16.msra.mxu0 0
        %314 = vmatprep.mubr.bf16.mxu0 0
        %315 = vmatmul.mubr.bf16.gmra.mrb[0].mxu0 %v265
        %v316 = vpop.f32.mrb[0].mxu0
        %v317 = vadd.f32 0.0, %v316
        %v318 = vpop.f32.mrb[0].mxu0
        %v319 = vpop.f32.mrb[0].mxu0
        %v320 = vadd.f32 0.0, %v319
        %v321 = vpop.f32.mrb[0].mxu0
        %322 = vmatprep.mubr.bf16.mxu0 0
        %323 = vmatmul.mubr.bf16.gmra.mrb[0].mxu0 %v268
        %v324 = vpop.f32.mrb[0].mxu0
        %v325 = vadd.f32 0.0, %v324
        %v326 = vpop.f32.mrb[0].mxu0
        %v327 = vpop.f32.mrb[0].mxu0
        %v328 = vadd.f32 0.0, %v327
        %v329 = vpop.f32.mrb[0].mxu0
        %330 = vmatprep.mubr.bf16.mxu0 0
        %331 = vmatmul.mubr.bf16.gmra.mrb[0].mxu0 %v271
        %v332 = vpop.f32.mrb[0].mxu0
        %v333 = vadd.f32 0.0, %v332
        %v334 = vpop.f32.mrb[0].mxu0
        %v335 = vpop.f32.mrb[0].mxu0
        %v336 = vadd.f32 0.0, %v335
        %v337 = vpop.f32.mrb[0].mxu0
        %338 = vmatprep.mubr.bf16.mxu0 0
        %339 = vmatmul.mubr.bf16.gmra.mrb[0].mxu0 %v274
        %v340 = vpop.f32.mrb[0].mxu0
        %v341 = vadd.f32 0.0, %v340
        %v342 = vpop.f32.mrb[0].mxu0
        %v343 = vpop.f32.mrb[0].mxu0
        %v344 = vadd.f32 0.0, %v343
        %v345 = vpop.f32.mrb[0].mxu0
        %346 = vmatprep.mubr.bf16.mxu0 0
        %347 = vmatmul.mubr.bf16.gmra.mrb[0].mxu0 %v277
        %v348 = vpop.f32.mrb[0].mxu0
        %v349 = vadd.f32 0.0, %v348
        %v350 = vpop.f32.mrb[0].mxu0
        %v351 = vpop.f32.mrb[0].mxu0
        %v352 = vadd.f32 0.0, %v351
        %v353 = vpop.f32.mrb[0].mxu0
        %354 = vmatprep.mubr.bf16.mxu0 0
        %355 = vmatmul.mubr.bf16.gmra.mrb[0].mxu0 %v280
        %v356 = vpop.f32.mrb[0].mxu0
        %v357 = vadd.f32 0.0, %v356
        %v358 = vpop.f32.mrb[0].mxu0
        %v359 = vpop.f32.mrb[0].mxu0
        %v360 = vadd.f32 0.0, %v359
        %v361 = vpop.f32.mrb[0].mxu0
        %362 = vdwg.mxu0
        %v363 = vpack.c.bf16 %v320, %v317
        %v364 = vpack.c.bf16 %v328, %v325
        %v365 = vpack.c.bf16 %v336, %v333
        %v366 = vpack.c.bf16 %v344, %v341
        %v367 = vpack.c.bf16 %v352, %v349
        %v368 = vpack.c.bf16 %v360, %v357
        %vm369 = vcmask 64512
        %370 = vst.msk [vmem:[#allocation2] sm:$0xff] %vm369, %v363
        %372 = vrot.lane.b32.xlu0 %v364, 8
        %v373 = vpop.permute.xlu0 %372
        %vm375 = vcmask 130112
        %376 = vst.msk [vmem:[#allocation2] sm:$0xff] %vm375, %v373
        %378 = vrot.lane.b32.xlu0 %v365, 16
        %v379 = vpop.permute.xlu0 %378
        %vm381 = vcmask 195712
        %382 = vst.msk [vmem:[#allocation2] sm:$0xff] %vm381, %v379
        %384 = vrot.lane.b32.xlu0 %v366, 24
        %v385 = vpop.permute.xlu0 %384
        %vm387 = vcmask 261312
        %388 = vst.msk [vmem:[#allocation2] sm:$0xff] %vm387, %v385
        %390 = vrot.lane.b32.xlu0 %v367, 32
        %v391 = vpop.permute.xlu0 %390
        %vm393 = vcmask 326912
        %394 = vst.msk [vmem:[#allocation2] sm:$0xff] %vm393, %v391
        %396 = vrot.lane.b32.xlu0 %v368, 40
        %v397 = vpop.permute.xlu0 %396
        %vm399 = vcmask 392512
        %400 = vst.msk [vmem:[#allocation2] sm:$0xff] %vm399, %v397
        %v401 = vld [vmem:[%s230] sm:$0xf]
        %v402 = vld [vmem:[#allocation2] sm:$0xff]
        %v404 = vsel %vm263, %v401, 0
        %406 = vmatprep.subr.bf16.mxu0 0
        %407 = vmatpush1.bf16.msra.mxu0 %v402
        %408 = vmatprep.subr.bf16.mxu0 0
        %409 = vmatpush1.bf16.msra.mxu0 0
        %410 = vmatprep.subr.bf16.mxu0 0
        %411 = vmatpush1.bf16.msra.mxu0 0
        %412 = vmatprep.subr.bf16.mxu0 0
        %413 = vmatpush1.bf16.msra.mxu0 0
        %414 = vmatprep.subr.bf16.mxu0 0
        %415 = vmatpush1.bf16.msra.mxu0 0
        %416 = vmatprep.subr.bf16.mxu0 0
        %417 = vmatpush1.bf16.msra.mxu0 0
        %418 = vmatprep.subr.bf16.mxu0 0
        %419 = vmatpush1.bf16.msra.mxu0 0
        %420 = vmatprep.subr.bf16.mxu0 0
        %421 = vmatpush1.bf16.msra.mxu0 0
        %422 = vmatprep.subr.bf16.mxu0 0
        %423 = vmatpush1.bf16.msra.mxu0 0
        %424 = vmatprep.subr.bf16.mxu0 0
        %425 = vmatpush1.bf16.msra.mxu0 0
        %426 = vmatprep.subr.bf16.mxu0 0
        %427 = vmatpush1.bf16.msra.mxu0 0
        %428 = vmatprep.subr.bf16.mxu0 0
        %429 = vmatpush1.bf16.msra.mxu0 0
        %430 = vmatprep.subr.bf16.mxu0 0
        %431 = vmatpush1.bf16.msra.mxu0 0
        %432 = vmatprep.subr.bf16.mxu0 0
        %433 = vmatpush1.bf16.msra.mxu0 0
        %434 = vmatprep.subr.bf16.mxu0 0
        %435 = vmatpush1.bf16.msra.mxu0 0
        %436 = vmatprep.subr.bf16.mxu0 0
        %437 = vmatpush1.bf16.msra.mxu0 0
        %438 = vmatprep.mubr.bf16.mxu0 0
        %439 = vmatmul.mubr.bf16.gmra.mrb[0].mxu0 %v404
        %v440 = vpop.f32.mrb[0].mxu0
        %v441 = vadd.f32 0.0, %v440
        %v442 = vpop.f32.mrb[0].mxu0
        %v443 = vpop.f32.mrb[0].mxu0
        %v444 = vpop.f32.mrb[0].mxu0
        %445 = vdwg.mxu0
        %v446 = vpack.c.bf16 %v441, %v441
        %vm447 = vcmask 388096
        %448 = vst.msk [vmem:[%s216] sm:$0xf] %vm447, %v446
        %s449 = sand.u32 %s119, 1
        %s450 = scalar_lea.sflag [#allocation4], %s449
        %s451 = sand.u32 %s119, 1
        %s452 = smul.addr %s451, 4
        %s453 = scalar_lea.vmem [#allocation3], %s452
        // Predicated region
        $region33: #{tpu_custom_call.1} parent=31 // pred_check
          %p454 = pneg %p129
        $region34: #{tpu_custom_call.1} parent=31 // pred_check_branch
          %456 = sbr.rel (%p454) target = $region36
        $region35: #{tpu_custom_call.1} parent=31 // pred_region
          %s458 = ssub.s32 64, 64
          %459 = vsyncadd %s450, %s458
          %s460 = sadd.s32 %s22, %s21
          %s461 = smul.addr %s460, 64
          %s462 = scalar_lea.hbm %s3, %s461
          %s464 = sshll.u32 %s453, 4
          %s465 = int_to_ptr.vmem [resolvable:$true] %s464
          %467 = dma.vmem_to_hbm [thread:$0]  %s465, 64, %s462, %s450
        $region36: #{tpu_custom_call.1} parent=31 // pred_fallthru
          _
      $region32: #{tpu_custom_call.1} parent=5 // pred_fallthru
        _
      %p468 = scmp.le.s32.totalorder 2, %s12
      // Predicated region
      $region37: #{tpu_custom_call.1} parent=5 // pred_check
        %p469 = pneg %p468
      $region38: #{tpu_custom_call.1} parent=5 // pred_check_branch
        %471 = sbr.rel (%p469) target = $region40
      $region39: #{tpu_custom_call.1} parent=5 // pred_region
        %s472 = ssub.s32 %s12, 2
        // Predicated region
        $region41: #{tpu_custom_call.1} parent=39 // pred_check
          %p473 = pneg %p135
        $region42: #{tpu_custom_call.1} parent=39 // pred_check_branch
          %475 = sbr.rel (%p473) target = $region44
        $region43: #{tpu_custom_call.1} parent=39 // pred_region
          %s476 = sand.u32 %s120, 1
          %s477 = scalar_lea.sflag [#allocation4], %s476
          %s478 = sand.u32 %s120, 1
          %s479 = smul.addr %s478, 4
          %s480 = scalar_lea.vmem [#allocation3], %s479
          %481 = dma.done %s477, 64
        $region44: #{tpu_custom_call.1} parent=39 // pred_fallthru
          _
      $region40: #{tpu_custom_call.1} parent=5 // pred_fallthru
        _
    $region6: #{tpu_custom_call.1} parent=1 // loop_footer
      %s16 = sadd.s32 1, %s12
    $region7: #{tpu_custom_call.1} parent=1 // loop_footer_branch
      %11 = sbr.rel target = $region3
    $region8: #{tpu_custom_call.1} parent=1 // loop_exit
      _
    %482 = vsyncpa [#allocation4], 1
    %s483 = scalar_lea.sflag [#allocation4], 1
    %484 = vsyncpa %s483, 1

</llo_original>
